<compile_context>
chip_gen: v7x
topology: tpu7x:2x2x1
jax: 0.10.0
libtpu: 0.0.40
codegen_flags: <defaults>
</compile_context>

<pallas_src>
import functools
import math

import jax
import jax.numpy as jnp
from jax import lax
from jax.experimental import pallas as pl
from jax.experimental.pallas import tpu as pltpu

NEG_SLOPE = 0.01


def _triple(v):
    return (int(v),) * 3 if isinstance(v, int) else tuple(int(e) for e in v)


# ---------------------------------------------------------------------------
# Pallas kernel: block-diagonal matmul + bias + LeakyReLU + pool-group sum
# ---------------------------------------------------------------------------
def _conv_pool_kernel(p_ref, w_ref, b_ref, o_ref, *, kvol):
    # p_ref: (tm, fold*Kp) bf16  -- each lane-row holds `fold` pooled positions'
    #        conv patches for ONE pool tap; consecutive kvol rows = one window.
    # w_ref: (fold*Kp, fold*Cout) bf16 block-diagonal weights (pre-scaled 1/kvol)
    # b_ref: (1, fold*Cout) f32 bias, tiled fold times (pre-scaled 1/kvol)
    # o_ref: (1, tm // kvol, fold*Cout) lane-dense pooled output
    acc = jnp.dot(p_ref[...], w_ref[...], preferred_element_type=jnp.float32)
    acc = acc + b_ref[...]                                   # f32 epilogue
    act = jnp.where(acc >= 0, acc, NEG_SLOPE * acc)          # LeakyReLU
    tm, lanes = act.shape
    # 1/kvol is already folded into w/b, so the pool is a plain group-of-kvol
    # sublane sum (XLU) over full 128-lane vregs.
    pooled = jnp.sum(act.reshape(tm // kvol, kvol, lanes), axis=1)
    o_ref[...] = pooled.reshape(o_ref.shape).astype(o_ref.dtype)


# ---------------------------------------------------------------------------
# Wrapper: im2col glue (XLA), block-diagonal fold layout, tiling
# ---------------------------------------------------------------------------
def conv3d_leakyrelu_avgpool(x, w, b, *, padding, stride=1,
                             avg_kernel=2, avg_stride=2, avg_pad=0,
                             matmul_dtype=jnp.bfloat16,
                             lane_target=128,          # 256 is an option on v6e
                             tile_bytes_target=4 * 1024 * 1024,
                             min_grid_steps=8):
    N, Cin, D, H, W = x.shape
    Cout, Cin_w, KD, KH, KW = w.shape
    assert Cin_w == Cin
    pd, ph, pw = _triple(padding)
    sd, sh, sw = _triple(stride)

    Do = (D + 2 * pd - KD) // sd + 1
    Ho = (H + 2 * ph - KH) // sh + 1
    Wo = (W + 2 * pw - KW) // sw + 1

    pk = _triple(avg_kernel)
    ps = _triple(avg_stride)
    # TODO(synk): only non-overlapping, unpadded pooling (kernel == stride,
    # pad == 0 -- the nn.AvgPool3d configs used by this module) is fused here.
    assert pk == ps and all(p == 0 for p in _triple(avg_pad)), \
        "fused path needs AvgPool3d kernel==stride, padding==0"
    pkd, pkh, pkw = pk
    Dp, Hp, Wp = Do // pkd, Ho // pkh, Wo // pkw
    kvol = pkd * pkh * pkw
    assert Dp > 0 and Hp > 0 and Wp > 0

    # Lane fold: pack `fold` pooled positions side-by-side along the lanes.
    fold = lane_target // Cout if (Cout <= lane_target and lane_target % Cout == 0) else 1

    K = Cin * KD * KH * KW
    seg_align = 128 // math.gcd(fold, 128)   # makes fold*Kp a multiple of 128
    Kp = ((K + seg_align - 1) // seg_align) * seg_align

    # ---- im2col (XLA glue): channel-last rows ordered (pooled pos, pool tap) --
    x_cl = jnp.transpose(x.astype(matmul_dtype), (0, 2, 3, 4, 1))   # NDHWC
    x_cl = jnp.pad(x_cl, ((0, 0), (pd, pd), (ph, ph), (pw, pw), (0, 0)))

    Do2, Ho2, Wo2 = Dp * pkd, Hp * pkh, Wp * pkw   # conv extent consumed by the pool
    P = N * Dp * Hp * Wp
    taps = []
    for kd in range(KD):
        for kh in range(KH):
            for kw in range(KW):
                t = x_cl[:, kd:kd + sd * Do2:sd,
                            kh:kh + sh * Ho2:sh,
                            kw:kw + sw * Wo2:sw, :]            # (N, Do2, Ho2, Wo2, Cin)
                t = t.reshape(N, Dp, pkd, Hp, pkh, Wp, pkw, Cin)
                t = jnp.transpose(t, (0, 1, 3, 5, 2, 4, 6, 7)) # (N,Dp,Hp,Wp,di,hi,wi,Cin)
                taps.append(t.reshape(P, kvol, Cin))
    patches = jnp.concatenate(taps, axis=-1)                    # (P, kvol, K)
    if Kp != K:
        patches = jnp.pad(patches, ((0, 0), (0, 0), (0, Kp - K)))

    G = pl.cdiv(P, fold)                                        # pooled-position groups
    if G * fold != P:
        patches = jnp.pad(patches, ((0, G * fold - P), (0, 0), (0, 0)))
    # Fold: one lane-row = `fold` positions' patches for one pool tap; the kvol
    # taps of a group sit on consecutive sublanes (pool = sublane group reduce).
    lhs = (patches.reshape(G, fold, kvol, Kp)
                  .transpose(0, 2, 1, 3)
                  .reshape(G * kvol, fold * Kp))

    # ---- block-diagonal weights / tiled bias, 1/kvol folded in (exact) -------
    w2 = (jnp.transpose(w, (2, 3, 4, 1, 0)).reshape(K, Cout).astype(jnp.float32)
          * (1.0 / kvol))
    if Kp != K:
        w2 = jnp.pad(w2, ((0, Kp - K), (0, 0)))
    rhs = jnp.kron(jnp.eye(fold, dtype=jnp.float32), w2).astype(matmul_dtype)
    b2 = jnp.tile(b.astype(jnp.float32) * (1.0 / kvol), fold).reshape(1, fold * Cout)

    # ---- tiling: ~4 MiB patch tiles, >= min_grid_steps steps when possible ---
    itemsize = jnp.dtype(matmul_dtype).itemsize
    lane_bytes = fold * Kp * itemsize
    row_align = kvol * 8 // math.gcd(kvol, 8)        # lcm(kvol, 8)
    total_rows = G * kvol

    tm = max(row_align, (tile_bytes_target // lane_bytes) // row_align * row_align)
    if total_rows >= min_grid_steps * row_align:     # keep the grid pipelined on 2 TCs
        tm = min(tm, (total_rows // min_grid_steps) // row_align * row_align)
    tm = min(tm, pl.cdiv(total_rows, row_align) * row_align)
    M_rows = pl.cdiv(total_rows, tm) * tm
    if M_rows != total_rows:
        lhs = jnp.pad(lhs, ((0, M_rows - total_rows), (0, 0)))

    num_tiles = M_rows // tm
    rows_per_tile = tm // kvol

    # ---- VMEM budget (generation-aware: v5e 16 MiB scoped default, v7x 64 MiB
    #      physical).  Only raise the limit when the footprint needs it. -------
    vmem_need = (2 * tm * lane_bytes                                   # dbl-buffered LHS
                 + 2 * rhs.size * itemsize                             # resident RHS
                 + 2 * rows_per_tile * fold * Cout * jnp.dtype(x.dtype).itemsize
                 + (2 << 20))                                          # slack
    vmem_limit = None
    if vmem_need > (12 << 20):
        vmem_limit = int(min(vmem_need + (4 << 20), 48 << 20))

    out = pl.pallas_call(
        functools.partial(_conv_pool_kernel, kvol=kvol),
        out_shape=jax.ShapeDtypeStruct((num_tiles, rows_per_tile, fold * Cout),
                                       x.dtype),
        grid=(num_tiles,),
        in_specs=[
            pl.BlockSpec((tm, fold * Kp), lambda i: (i, 0)),
            pl.BlockSpec((fold * Kp, fold * Cout), lambda i: (0, 0)),  # resident
            pl.BlockSpec((1, fold * Cout), lambda i: (0, 0)),          # resident
        ],
        out_specs=pl.BlockSpec((1, rows_per_tile, fold * Cout),
                               lambda i: (i, 0, 0)),
        compiler_params=pltpu.CompilerParams(
            dimension_semantics=("parallel",),
            vmem_limit_bytes=vmem_limit),
    )(lhs, rhs, b2)

    # Unfold: (groups, fold*Cout) -> (positions, Cout) is a contiguous reshape;
    # only the small pooled tensor gets transposed back to NCDHW.
    pooled = out.reshape(M_rows // kvol, fold * Cout)[:G]
    pooled = pooled.reshape(G * fold, Cout)[:P]
    pooled = pooled.reshape(N, Dp, Hp, Wp, Cout)
    return jnp.transpose(pooled, (0, 4, 1, 2, 3))


# ---------------------------------------------------------------------------
# Pure-JAX reference (verification only)
# ---------------------------------------------------------------------------
def _reference(x, w, b, *, padding, stride=1, avg_kernel=2, avg_stride=2):
    Cout = w.shape[0]
    conv = lax.conv_general_dilated(
        x, w, window_strides=(stride,) * 3,
        padding=[(padding, padding)] * 3,
        dimension_numbers=('NCDHW', 'OIDHW', 'NCDHW'))
    conv = conv + b.reshape(1, Cout, 1, 1, 1)
    conv = jnp.where(conv >= 0, conv, NEG_SLOPE * conv)
    pooled = lax.reduce_window(
        conv, 0.0, lax.add,
        (1, 1, avg_kernel, avg_kernel, avg_kernel),
        (1, 1, avg_stride, avg_stride, avg_stride), 'VALID')
    return pooled / float(avg_kernel ** 3)


if __name__ == "__main__":
    key = jax.random.PRNGKey(0)
    k1, k2, k3 = jax.random.split(key, 3)

    # Small shapes consistent with the module: NCDHW input, kernel 3 conv,
    # 2x2x2 average pool.
    N, Cin, D, H, W = 2, 4, 8, 8, 8
    Cout, ksize, pad = 8, 3, 1

    x = jax.random.normal(k1, (N, Cin, D, H, W), jnp.float32)
    # Deterministic synthetic parameters (not a checkpoint load).
    w = jax.random.normal(k2, (Cout, Cin, ksize, ksize, ksize), jnp.float32) * 0.1
    b = jax.random.normal(k3, (Cout,), jnp.float32) * 0.1

    fused = jax.jit(functools.partial(conv3d_leakyrelu_avgpool, padding=pad,
                                      stride=1, avg_kernel=2, avg_stride=2,
                                      avg_pad=0))
    out = jax.block_until_ready(fused(x, w, b))

    ref = _reference(x, w, b, padding=pad, stride=1, avg_kernel=2, avg_stride=2)
    assert out.shape == ref.shape == (N, Cout, D // 2, H // 2, W // 2), out.shape
    # bf16 matmul inputs (f32 accumulate) -> loosened tolerance vs f32 reference.
    assert jnp.allclose(out, ref, atol=2e-2, rtol=2e-2), "mismatch vs reference"

    print("KERNEL_OK")
</pallas_src>

<mosaic_0001>
module attributes {stable_mosaic.version = 11 : i64} {
  func.func @_conv_pool_kernel(%arg0: i32, %arg1: memref<8x1792xbf16, #tpu.memory_space<vmem>>, %arg2: memref<1792x128xbf16, #tpu.memory_space<vmem>>, %arg3: memref<1x128xf32, #tpu.memory_space<vmem>>, %arg4: memref<1x1x128xf32, #tpu.memory_space<vmem>>) attributes {dimension_semantics = [#tpu.dimension_semantics<parallel>], iteration_bounds = array<i64: 8>, scalar_prefetch = 0 : i64, scratch_operands = 0 : i64, tpu.core_type = #tpu.core_type<tc>, window_params = [{transform_indices = @transform_0, window_bounds = array<i64: 8, 1792>}, {pipeline_mode = #tpu.pipeline_mode<synchronous>, transform_indices = @transform_1, window_bounds = array<i64: 1792, 128>}, {pipeline_mode = #tpu.pipeline_mode<synchronous>, transform_indices = @transform_2, window_bounds = array<i64: 1, 128>}, {transform_indices = @transform_3, window_bounds = array<i64: 1, 1, 128>}]} {
    %c0 = arith.constant 0 : index
    %c0_0 = arith.constant 0 : index
    %0 = vector.load %arg1[%c0, %c0_0] : memref<8x1792xbf16, #tpu.memory_space<vmem>>, vector<8x1792xbf16>
    %c0_1 = arith.constant 0 : index
    %c0_2 = arith.constant 0 : index
    %1 = vector.load %arg2[%c0_1, %c0_2] : memref<1792x128xbf16, #tpu.memory_space<vmem>>, vector<1792x128xbf16>
    %cst = arith.constant dense<0.000000e+00> : vector<8x128xf32>
    %2 = tpu.matmul %0, %1, %cst {dimension_numbers = #tpu.dot_dimension_numbers<[1], [0], [0], [1], [0, 0, 1, 1], [], []>} : vector<8x1792xbf16>, vector<1792x128xbf16>, vector<8x128xf32> -> vector<8x128xf32>
    %c0_3 = arith.constant 0 : index
    %c0_4 = arith.constant 0 : index
    %3 = vector.load %arg3[%c0_3, %c0_4] : memref<1x128xf32, #tpu.memory_space<vmem>>, vector<1x128xf32>
    %4 = vector.broadcast %3 : vector<1x128xf32> to vector<8x128xf32>
    %5 = arith.addf %2, %4 : vector<8x128xf32>
    %cst_5 = arith.constant 0.000000e+00 : f32
    %6 = vector.broadcast %cst_5 : f32 to vector<8x128xf32>
    %7 = arith.cmpf oge, %5, %6 : vector<8x128xf32>
    %cst_6 = arith.constant 0.00999999977 : f32
    %8 = vector.broadcast %cst_6 : f32 to vector<8x128xf32>
    %9 = arith.mulf %8, %5 : vector<8x128xf32>
    %10 = arith.select %7, %5, %9 : vector<8x128xi1>, vector<8x128xf32>
    %11 = vector.shape_cast %10 : vector<8x128xf32> to vector<1x8x128xf32>
    %cst_7 = arith.constant dense<0.000000e+00> : vector<1x128xf32>
    %12 = vector.multi_reduction <add>, %11, %cst_7 [1] : vector<1x8x128xf32> to vector<1x128xf32>
    %13 = vector.shape_cast %12 : vector<1x128xf32> to vector<1x1x128xf32>
    %c0_8 = arith.constant 0 : index
    %c0_9 = arith.constant 0 : index
    %c0_10 = arith.constant 0 : index
    %14 = vector.load %arg4[%c0_8, %c0_9, %c0_10] : memref<1x1x128xf32, #tpu.memory_space<vmem>>, vector<1x1x128xf32>
    tpu.vector_store %arg4[%c0_8, %c0_9, %c0_10], %13 {strides = array<i32>} : memref<1x1x128xf32, #tpu.memory_space<vmem>>, vector<1x1x128xf32>,
    return
  }
  func.func @transform_0(%arg0: i32) -> (i32, i32) {
    %c0_i32 = arith.constant 0 : i32
    %c0_i32_0 = arith.constant 0 : i32
    return %arg0, %c0_i32 : i32, i32
  }
  func.func @transform_1(%arg0: i32) -> (i32, i32) {
    %c0_i32 = arith.constant 0 : i32
    %c0_i32_0 = arith.constant 0 : i32
    %c0_i32_1 = arith.constant 0 : i32
    return %c0_i32, %c0_i32_0 : i32, i32
  }
  func.func @transform_2(%arg0: i32) -> (i32, i32) {
    %c0_i32 = arith.constant 0 : i32
    %c0_i32_0 = arith.constant 0 : i32
    %c0_i32_1 = arith.constant 0 : i32
    return %c0_i32, %c0_i32_0 : i32, i32
  }
  func.func @transform_3(%arg0: i32) -> (i32, i32, i32) {
    %c0_i32 = arith.constant 0 : i32
    %c0_i32_0 = arith.constant 0 : i32
    %c0_i32_1 = arith.constant 0 : i32
    return %arg0, %c0_i32, %c0_i32_0 : i32, i32, i32
  }
}

</mosaic_0001>

<llo_original>
// kernel: tile.8
$region0: #{tile.8}
  #allocation0 [shape = 's32[1]{0}', space=sflag, size = 0x4, scoped, tag = 'scoped memory for tile.8']
  %s0 = inlined_call_operand.vmem [shape: f32[8], index: 0, kind: input, shape index: {}]
  %s1 = inlined_call_operand.vmem [shape: f32[16,8], index: 1, kind: output, shape index: {}]
  // Predicated region
  $region2: #{tile.8} parent=0 // pred_check
    _
  $region3: #{tile.8} parent=0 // pred_check_branch
    %3 = sbr.rel (0) target = $region5
  $region4: #{tile.8} parent=0 // pred_region
    _
  $region5: #{tile.8} parent=0 // pred_fallthru
    _
  %v4 = vld [vmem:[%s0] ss:$0 sm:$0xff]
  %5 = vst [vmem:[%s1] sm:$0xff] %v4
  %s6 = scalar_lea.vmem %s1, 8
  %7 = vst [vmem:[%s6] sm:$0xff] %v4

// kernel: tile.9
$region0: #{tile.9}
  %s0 = inlined_call_operand.vmem [shape: f32[16,8], index: 0, kind: input, shape index: {}]
  %s1 = inlined_call_operand.vmem [shape: f32[1,128], index: 1, kind: output, shape index: {}]
  $region1: #{tile.9} parent=0
    #allocation0 [shape = 'u8[4096]{0}', space=vmem, size = 0x1000, scoped, tag = 'scoped mem for output reshape']
    %v2 = vld [vmem:[%s0] sm:$0x1]
    %vm3 = vcmask 64512
    %4 = vst.msk [vmem:[#allocation0] sm:$0x1] %vm3, %v2
    %s5 = scalar_lea.vmem %s0, 15
    %v6 = vld [vmem:[%s5] sm:$0x1]
    %7 = vrot.lane.b32.xlu0 %v6, 120
    %v8 = vpop.permute.xlu0 %7
    %vm9 = vcmask 1048512
    %10 = vst.msk [vmem:[#allocation0] sm:$0x1] %vm9, %v8
    %s11 = scalar_lea.vmem %s0, 14
    %v12 = vld [vmem:[%s11] sm:$0x1]
    %13 = vrot.lane.b32.xlu0 %v12, 112
    %v14 = vpop.permute.xlu0 %13
    %vm15 = vcmask 982912
    %16 = vst.msk [vmem:[#allocation0] sm:$0x1] %vm15, %v14
    %s17 = scalar_lea.vmem %s0, 13
    %v18 = vld [vmem:[%s17] sm:$0x1]
    %19 = vrot.lane.b32.xlu0 %v18, 104
    %v20 = vpop.permute.xlu0 %19
    %vm21 = vcmask 917312
    %22 = vst.msk [vmem:[#allocation0] sm:$0x1] %vm21, %v20
    %s23 = scalar_lea.vmem %s0, 12
    %v24 = vld [vmem:[%s23] sm:$0x1]
    %25 = vrot.lane.b32.xlu0 %v24, 96
    %v26 = vpop.permute.xlu0 %25
    %vm27 = vcmask 851712
    %28 = vst.msk [vmem:[#allocation0] sm:$0x1] %vm27, %v26
    %s29 = scalar_lea.vmem %s0, 11
    %v30 = vld [vmem:[%s29] sm:$0x1]
    %31 = vrot.lane.b32.xlu0 %v30, 88
    %v32 = vpop.permute.xlu0 %31
    %vm33 = vcmask 786112
    %34 = vst.msk [vmem:[#allocation0] sm:$0x1] %vm33, %v32
    %s35 = scalar_lea.vmem %s0, 10
    %v36 = vld [vmem:[%s35] sm:$0x1]
    %37 = vrot.lane.b32.xlu0 %v36, 80
    %v38 = vpop.permute.xlu0 %37
    %vm39 = vcmask 720512
    %40 = vst.msk [vmem:[#allocation0] sm:$0x1] %vm39, %v38
    %s41 = scalar_lea.vmem %s0, 9
    %v42 = vld [vmem:[%s41] sm:$0x1]
    %43 = vrot.lane.b32.xlu0 %v42, 72
    %v44 = vpop.permute.xlu0 %43
    %vm45 = vcmask 654912
    %46 = vst.msk [vmem:[#allocation0] sm:$0x1] %vm45, %v44
    %s47 = scalar_lea.vmem %s0, 8
    %v48 = vld [vmem:[%s47] sm:$0x1]
    %49 = vrot.lane.b32.xlu0 %v48, 64
    %v50 = vpop.permute.xlu0 %49
    %vm51 = vcmask 589312
    %52 = vst.msk [vmem:[#allocation0] sm:$0x1] %vm51, %v50
    %s53 = scalar_lea.vmem %s0, 7
    %v54 = vld [vmem:[%s53] sm:$0x1]
    %55 = vrot.lane.b32.xlu0 %v54, 56
    %v56 = vpop.permute.xlu0 %55
    %vm57 = vcmask 523712
    %58 = vst.msk [vmem:[#allocation0] sm:$0x1] %vm57, %v56
    %s59 = scalar_lea.vmem %s0, 6
    %v60 = vld [vmem:[%s59] sm:$0x1]
    %61 = vrot.lane.b32.xlu0 %v60, 48
    %v62 = vpop.permute.xlu0 %61
    %vm63 = vcmask 458112
    %64 = vst.msk [vmem:[#allocation0] sm:$0x1] %vm63, %v62
    %s65 = scalar_lea.vmem %s0, 5
    %v66 = vld [vmem:[%s65] sm:$0x1]
    %67 = vrot.lane.b32.xlu0 %v66, 40
    %v68 = vpop.permute.xlu0 %67
    %vm69 = vcmask 392512
    %70 = vst.msk [vmem:[#allocation0] sm:$0x1] %vm69, %v68
    %s71 = scalar_lea.vmem %s0, 4
    %v72 = vld [vmem:[%s71] sm:$0x1]
    %73 = vrot.lane.b32.xlu0 %v72, 32
    %v74 = vpop.permute.xlu0 %73
    %vm75 = vcmask 326912
    %76 = vst.msk [vmem:[#allocation0] sm:$0x1] %vm75, %v74
    %s77 = scalar_lea.vmem %s0, 3
    %v78 = vld [vmem:[%s77] sm:$0x1]
    %79 = vrot.lane.b32.xlu0 %v78, 24
    %v80 = vpop.permute.xlu0 %79
    %vm81 = vcmask 261312
    %82 = vst.msk [vmem:[#allocation0] sm:$0x1] %vm81, %v80
    %s83 = scalar_lea.vmem %s0, 2
    %v84 = vld [vmem:[%s83] sm:$0x1]
    %85 = vrot.lane.b32.xlu0 %v84, 16
    %v86 = vpop.permute.xlu0 %85
    %vm87 = vcmask 195712
    %88 = vst.msk [vmem:[#allocation0] sm:$0x1] %vm87, %v86
    %s89 = scalar_lea.vmem %s0, 1
    %v90 = vld [vmem:[%s89] sm:$0x1]
    %91 = vrot.lane.b32.xlu0 %v90, 8
    %v92 = vpop.permute.xlu0 %91
    %vm93 = vcmask 130112
    %94 = vst.msk [vmem:[#allocation0] sm:$0x1] %vm93, %v92
    %s96 = sshllo.u32 0, 1
    %v98 = vld [vmem:[#allocation0] sm:%s96]
    %s99 = sshllo.u32 0, 1
    %100 = vst [vmem:[%s1] sm:%s99] %v98

// kernel: conv3d_leakyrelu_avgpool.1
$region0: #{conv3d_leakyrelu_avgpool.1}
  #allocation0 [shape = 'u32[]', space=smem, size = 0x4, offset = 0x4, fixed_abs, tag = 'smem constant byte address 0x4 - core index']
  #allocation1 [shape = 'u32[144,128]{1,0:T(1,128)}', space=vmem, size = 0x12000, scoped, tag = 'internal scratch']
  %s0 = inlined_call_operand.vmem [shape: bf16[64,1792], index: 0, kind: input, shape index: {}]
  %s1 = inlined_call_operand.vmem [shape: bf16[1792,128], index: 1, kind: input, shape index: {}]
  %s2 = inlined_call_operand.vmem [shape: f32[1,128], index: 2, kind: input, shape index: {}]
  %s3 = inlined_call_operand.vmem [shape: f32[8,1,128], index: 3, kind: output, shape index: {}]
  %s4 = sld [smem:[#allocation0]]
  $region45: #{conv3d_leakyrelu_avgpool.1} parent=0
    _
  %s6 = ssub.s32 1, %s4
  %s7 = scalar_select 0, %s6, %s4
  loop: start=0, step=1, limit=10
  $region2: #{conv3d_leakyrelu_avgpool.1} parent=0 // loop_pre_header
    _
  $region3: #{conv3d_leakyrelu_avgpool.1} parent=0 // loop_header
    %s9 = sphi 0, %s13
    %p10 = scmp.ge.s32.totalorder %s9, 10
    %s19 = sphi 0, %s21
    %s22 = sphi 0, %s19
    %s23 = sphi 0, %s22
    %s39 = sphi 0, %s23
    %s43 = sphi 0, %s43
    %s45 = sphi 0, %s43
    %s46 = sphi 0, %s45
    %s60 = sphi 0, %s46
    %s64 = sphi 0, %s64
    %s66 = sphi 0, %s64
    %s67 = sphi 0, %s66
    %s81 = sphi 0, %s67
    %s87 = sphi 0, %s89
    %s90 = sphi 0, %s87
    %s91 = sphi 0, %s90
    %s107 = sphi 0, %s91
  $region4: #{conv3d_leakyrelu_avgpool.1} parent=0 // loop_header_branch
    %12 = sbr.rel (%p10) target = $region8
  $region5: #{conv3d_leakyrelu_avgpool.1} parent=0 // loop_body
    %s14 = ssub.s32 %s9, 1
    %s15 = ssub.s32 %s9, 2
    %s16 = sadd.s32 %s9, 1
    %s17 = ssub.s32 %s9, %s16
    %p18 = scmp.eq.s32.totalorder %s17, 0
    %s20 = sadd.s32 %s19, 1
    %s21 = scalar_select %p18, %s19, %s20
    %p24 = pneg %p18
    %p25 = scmp.eq.s32.totalorder %s9, 7
    %p26 = por %p24, %p25
    %p27 = scmp.ne.s32.totalorder %s19, %s22
    %p28 = scmp.eq.s32.totalorder %s9, 0
    %p29 = por %p27, %p28
    %p30 = scmp.ne.s32.totalorder %s19, %s22
    %p31 = scmp.eq.s32.totalorder %s14, 7
    %p32 = por %p30, %p31
    %p33 = scmp.ne.s32.totalorder %s22, %s23
    %p34 = scmp.eq.s32.totalorder %s14, 0
    %p35 = por %p33, %p34
    %p36 = scmp.ne.s32.totalorder %s22, %s23
    %p37 = scmp.eq.s32.totalorder %s15, 7
    %p38 = por %p36, %p37
    %p40 = scmp.ne.s32.totalorder %s23, %s39
    %p41 = scmp.eq.s32.totalorder %s15, 0
    %p42 = por %p40, %p41
    %s44 = sadd.s32 %s43, 1
    %p47 = scmp.eq.s32.totalorder %s9, 7
    %p48 = scmp.ne.s32.totalorder %s43, %s45
    %p49 = scmp.eq.s32.totalorder %s9, 0
    %p50 = por %p48, %p49
    %p51 = scmp.ne.s32.totalorder %s43, %s45
    %p52 = scmp.eq.s32.totalorder %s14, 7
    %p53 = por %p51, %p52
    %p54 = scmp.ne.s32.totalorder %s45, %s46
    %p55 = scmp.eq.s32.totalorder %s14, 0
    %p56 = por %p54, %p55
    %p57 = scmp.ne.s32.totalorder %s45, %s46
    %p58 = scmp.eq.s32.totalorder %s15, 7
    %p59 = por %p57, %p58
    %p61 = scmp.ne.s32.totalorder %s46, %s60
    %p62 = scmp.eq.s32.totalorder %s15, 0
    %p63 = por %p61, %p62
    %s65 = sadd.s32 %s64, 1
    %p68 = scmp.eq.s32.totalorder %s9, 7
    %p69 = scmp.ne.s32.totalorder %s64, %s66
    %p70 = scmp.eq.s32.totalorder %s9, 0
    %p71 = por %p69, %p70
    %p72 = scmp.ne.s32.totalorder %s64, %s66
    %p73 = scmp.eq.s32.totalorder %s14, 7
    %p74 = por %p72, %p73
    %p75 = scmp.ne.s32.totalorder %s66, %s67
    %p76 = scmp.eq.s32.totalorder %s14, 0
    %p77 = por %p75, %p76
    %p78 = scmp.ne.s32.totalorder %s66, %s67
    %p79 = scmp.eq.s32.totalorder %s15, 7
    %p80 = por %p78, %p79
    %p82 = scmp.ne.s32.totalorder %s67, %s81
    %p83 = scmp.eq.s32.totalorder %s15, 0
    %p84 = por %p82, %p83
    %s85 = ssub.s32 %s9, %s16
    %p86 = scmp.eq.s32.totalorder %s85, 0
    %s88 = sadd.s32 %s87, 1
    %s89 = scalar_select %p86, %s87, %s88
    %p92 = pneg %p86
    %p93 = scmp.eq.s32.totalorder %s9, 7
    %p94 = por %p92, %p93
    %p95 = scmp.ne.s32.totalorder %s87, %s90
    %p96 = scmp.eq.s32.totalorder %s9, 0
    %p97 = por %p95, %p96
    %p98 = scmp.ne.s32.totalorder %s87, %s90
    %p99 = scmp.eq.s32.totalorder %s14, 7
    %p100 = por %p98, %p99
    %p101 = scmp.ne.s32.totalorder %s90, %s91
    %p102 = scmp.eq.s32.totalorder %s14, 0
    %p103 = por %p101, %p102
    %p104 = scmp.ne.s32.totalorder %s90, %s91
    %p105 = scmp.eq.s32.totalorder %s15, 7
    %p106 = por %p104, %p105
    %p108 = scmp.ne.s32.totalorder %s91, %s107
    %p109 = scmp.eq.s32.totalorder %s15, 0
    %p110 = por %p108, %p109
    %p111 = scmp.le.s32.totalorder 1, %s9
    %p112 = scmp.lt.s32.totalorder %s9, 9
    %p113 = pnand %p111, %p112
    %p114 = pneg %p113
    // Predicated region
    $region9: #{conv3d_leakyrelu_avgpool.1} parent=5 // pred_check
      _
    $region10: #{conv3d_leakyrelu_avgpool.1} parent=5 // pred_check_branch
      %116 = sbr.rel (%p113) target = $region12
    $region11: #{conv3d_leakyrelu_avgpool.1} parent=5 // pred_region
      %s117 = ssub.s32 %s9, 1
      // Predicated region
      $region13: #{conv3d_leakyrelu_avgpool.1} parent=11 // pred_check
        %p118 = pneg %p56
      $region14: #{conv3d_leakyrelu_avgpool.1} parent=11 // pred_check_branch
        %120 = sbr.rel (%p118) target = $region16
      $region15: #{conv3d_leakyrelu_avgpool.1} parent=11 // pred_region
        _
      $region16: #{conv3d_leakyrelu_avgpool.1} parent=11 // pred_fallthru
        _
      // Predicated region
      $region17: #{conv3d_leakyrelu_avgpool.1} parent=11 // pred_check
        %p121 = pneg %p77
      $region18: #{conv3d_leakyrelu_avgpool.1} parent=11 // pred_check_branch
        %123 = sbr.rel (%p121) target = $region20
      $region19: #{conv3d_leakyrelu_avgpool.1} parent=11 // pred_region
        _
      $region20: #{conv3d_leakyrelu_avgpool.1} parent=11 // pred_fallthru
        _
    $region12: #{conv3d_leakyrelu_avgpool.1} parent=5 // pred_fallthru
      _
    %p124 = scmp.lt.s32.totalorder %s9, 8
    // Predicated region
    $region21: #{conv3d_leakyrelu_avgpool.1} parent=5 // pred_check
      %p125 = pneg %p124
    $region22: #{conv3d_leakyrelu_avgpool.1} parent=5 // pred_check_branch
      %127 = sbr.rel (%p125) target = $region24
    $region23: #{conv3d_leakyrelu_avgpool.1} parent=5 // pred_region
      // Predicated region
      $region25: #{conv3d_leakyrelu_avgpool.1} parent=23 // pred_check
        %p128 = pneg %p29
      $region26: #{conv3d_leakyrelu_avgpool.1} parent=23 // pred_check_branch
        %130 = sbr.rel (%p128) target = $region28
      $region27: #{conv3d_leakyrelu_avgpool.1} parent=23 // pred_region
        %p131 = scmp.lt.s32.totalorder %s9, 7
        %s132 = scalar_select %p131, %s9, 7
        %s133 = smul.addr %s132, 14
        %s134 = smul.addr %s133, 4
        %s135 = scalar_lea.vmem %s0, %s134
      $region28: #{conv3d_leakyrelu_avgpool.1} parent=23 // pred_fallthru
        _
    $region24: #{conv3d_leakyrelu_avgpool.1} parent=5 // pred_fallthru
      _
    %p136 = scmp.le.s32.totalorder 1, %s9
    %p137 = scmp.lt.s32.totalorder %s9, 9
    %p138 = pnand %p136, %p137
    %p139 = pneg %p138
    // Predicated region
    $region29: #{conv3d_leakyrelu_avgpool.1} parent=5 // pred_check
      _
    $region30: #{conv3d_leakyrelu_avgpool.1} parent=5 // pred_check_branch
      %141 = sbr.rel (%p138) target = $region32
    $region31: #{conv3d_leakyrelu_avgpool.1} parent=5 // pred_region
      %s142 = ssub.s32 %s9, 1
      %p143 = scmp.lt.s32.totalorder %s14, 7
      %s144 = scalar_select %p143, %s14, 7
      %s145 = smul.addr %s144, 14
      %s146 = smul.addr %s145, 4
      %s147 = scalar_lea.vmem %s0, %s146
      %p148 = pneg %p35
      %p149 = pneg %p32
      %p150 = pneg %p56
      %p151 = pneg %p53
      %p152 = pneg %p77
      %p153 = pneg %p74
      %p154 = pneg %p103
      %p155 = pneg %p100
      %p156 = scmp.lt.s32.totalorder %s14, 7
      %s157 = scalar_select %p156, %s14, 7
      %s158 = scalar_lea.vmem %s3, %s157
      %p159 = scmp.lt.s32.totalorder %s14, 7
      %s160 = scalar_select %p159, %s14, 7
      %s161 = smul.addr %s160, 14
      %s162 = smul.addr %s161, 4
      %s163 = scalar_lea.vmem %s0, %s162
      %p164 = scmp.lt.s32.totalorder %s14, 7
      %s165 = scalar_select %p164, %s14, 7
      %s166 = scalar_lea.vmem %s3, %s165
      %v168 = vld [vmem:[%s163] sm:$0xff]
      %v169 = vld [vmem:[%s163 + $0x8] sm:$0xff]
      %v170 = vld [vmem:[%s163 + $0x10] sm:$0xff]
      %v171 = vld [vmem:[%s163 + $0x18] sm:$0xff]
      %v172 = vld [vmem:[%s163 + $0x20] sm:$0xff]
      %v173 = vld [vmem:[%s163 + $0x28] sm:$0xff]
      %v174 = vld [vmem:[%s163 + $0x30] sm:$0xff]
      %v175 = vld [vmem:[%s1] sm:$0xf]
      %v176 = vld [vmem:[%s1 + $0x4] sm:$0xf]
      %v177 = vld [vmem:[%s1 + $0x8] sm:$0xf]
      %v178 = vld [vmem:[%s1 + $0xc] sm:$0xf]
      %v179 = vld [vmem:[%s1 + $0x10] sm:$0xf]
      %v180 = vld [vmem:[%s1 + $0x14] sm:$0xf]
      %v181 = vld [vmem:[%s1 + $0x18] sm:$0xf]
      %v182 = vld [vmem:[%s1 + $0x1c] sm:$0xf]
      %v183 = vld [vmem:[%s1 + $0x20] sm:$0xf]
      %v184 = vld [vmem:[%s1 + $0x24] sm:$0xf]
      %v185 = vld [vmem:[%s1 + $0x28] sm:$0xf]
      %v186 = vld [vmem:[%s1 + $0x2c] sm:$0xf]
      %v187 = vld [vmem:[%s1 + $0x30] sm:$0xf]
      %v188 = vld [vmem:[%s1 + $0x34] sm:$0xf]
      %v189 = vld [vmem:[%s1 + $0x38] sm:$0xf]
      %v190 = vld [vmem:[%s1 + $0x3c] sm:$0xf]
      %v191 = vld [vmem:[%s1 + $0x40] sm:$0xf]
      %v192 = vld [vmem:[%s1 + $0x44] sm:$0xf]
      %v193 = vld [vmem:[%s1 + $0x48] sm:$0xf]
      %v194 = vld [vmem:[%s1 + $0x4c] sm:$0xf]
      %v195 = vld [vmem:[%s1 + $0x50] sm:$0xf]
      %v196 = vld [vmem:[%s1 + $0x54] sm:$0xf]
      %v197 = vld [vmem:[%s1 + $0x58] sm:$0xf]
      %v198 = vld [vmem:[%s1 + $0x5c] sm:$0xf]
      %v199 = vld [vmem:[%s1 + $0x60] sm:$0xf]
      %v200 = vld [vmem:[%s1 + $0x64] sm:$0xf]
      %v201 = vld [vmem:[%s1 + $0x68] sm:$0xf]
      %v202 = vld [vmem:[%s1 + $0x6c] sm:$0xf]
      %v203 = vld [vmem:[%s1 + $0x70] sm:$0xf]
      %v204 = vld [vmem:[%s1 + $0x74] sm:$0xf]
      %v205 = vld [vmem:[%s1 + $0x78] sm:$0xf]
      %v206 = vld [vmem:[%s1 + $0x7c] sm:$0xf]
      %v207 = vld [vmem:[%s1 + $0x80] sm:$0xf]
      %v208 = vld [vmem:[%s1 + $0x84] sm:$0xf]
      %v209 = vld [vmem:[%s1 + $0x88] sm:$0xf]
      %v210 = vld [vmem:[%s1 + $0x8c] sm:$0xf]
      %v211 = vld [vmem:[%s1 + $0x90] sm:$0xf]
      %v212 = vld [vmem:[%s1 + $0x94] sm:$0xf]
      %v213 = vld [vmem:[%s1 + $0x98] sm:$0xf]
      %v214 = vld [vmem:[%s1 + $0x9c] sm:$0xf]
      %v215 = vld [vmem:[%s1 + $0xa0] sm:$0xf]
      %v216 = vld [vmem:[%s1 + $0xa4] sm:$0xf]
      %v217 = vld [vmem:[%s1 + $0xa8] sm:$0xf]
      %v218 = vld [vmem:[%s1 + $0xac] sm:$0xf]
      %v219 = vld [vmem:[%s1 + $0xb0] sm:$0xf]
      %v220 = vld [vmem:[%s1 + $0xb4] sm:$0xf]
      %v221 = vld [vmem:[%s1 + $0xb8] sm:$0xf]
      %v222 = vld [vmem:[%s1 + $0xbc] sm:$0xf]
      %v223 = vld [vmem:[%s1 + $0xc0] sm:$0xf]
      %v224 = vld [vmem:[%s1 + $0xc4] sm:$0xf]
      %v225 = vld [vmem:[%s1 + $0xc8] sm:$0xf]
      %v226 = vld [vmem:[%s1 + $0xcc] sm:$0xf]
      %v227 = vld [vmem:[%s1 + $0xd0] sm:$0xf]
      %v228 = vld [vmem:[%s1 + $0xd4] sm:$0xf]
      %v229 = vld [vmem:[%s1 + $0xd8] sm:$0xf]
      %v230 = vld [vmem:[%s1 + $0xdc] sm:$0xf]
      %v231 = vld [vmem:[%s1 + $0xe0] sm:$0xf]
      %v232 = vld [vmem:[%s1 + $0xe4] sm:$0xf]
      %v233 = vld [vmem:[%s1 + $0xe8] sm:$0xf]
      %v234 = vld [vmem:[%s1 + $0xec] sm:$0xf]
      %v235 = vld [vmem:[%s1 + $0xf0] sm:$0xf]
      %v236 = vld [vmem:[%s1 + $0xf4] sm:$0xf]
      %v237 = vld [vmem:[%s1 + $0xf8] sm:$0xf]
      %v238 = vld [vmem:[%s1 + $0xfc] sm:$0xf]
      %v239 = vld [vmem:[%s1 + $0x100] sm:$0xf]
      %v240 = vld [vmem:[%s1 + $0x104] sm:$0xf]
      %v241 = vld [vmem:[%s1 + $0x108] sm:$0xf]
      %v242 = vld [vmem:[%s1 + $0x10c] sm:$0xf]
      %v243 = vld [vmem:[%s1 + $0x110] sm:$0xf]
      %v244 = vld [vmem:[%s1 + $0x114] sm:$0xf]
      %v245 = vld [vmem:[%s1 + $0x118] sm:$0xf]
      %v246 = vld [vmem:[%s1 + $0x11c] sm:$0xf]
      %v247 = vld [vmem:[%s1 + $0x120] sm:$0xf]
      %v248 = vld [vmem:[%s1 + $0x124] sm:$0xf]
      %v249 = vld [vmem:[%s1 + $0x128] sm:$0xf]
      %v250 = vld [vmem:[%s1 + $0x12c] sm:$0xf]
      %v251 = vld [vmem:[%s1 + $0x130] sm:$0xf]
      %v252 = vld [vmem:[%s1 + $0x134] sm:$0xf]
      %v253 = vld [vmem:[%s1 + $0x138] sm:$0xf]
      %v254 = vld [vmem:[%s1 + $0x13c] sm:$0xf]
      %v255 = vld [vmem:[%s1 + $0x140] sm:$0xf]
      %v256 = vld [vmem:[%s1 + $0x144] sm:$0xf]
      %v257 = vld [vmem:[%s1 + $0x148] sm:$0xf]
      %v258 = vld [vmem:[%s1 + $0x14c] sm:$0xf]
      %v259 = vld [vmem:[%s1 + $0x150] sm:$0xf]
      %v260 = vld [vmem:[%s1 + $0x154] sm:$0xf]
      %v261 = vld [vmem:[%s1 + $0x158] sm:$0xf]
      %v262 = vld [vmem:[%s1 + $0x15c] sm:$0xf]
      %v263 = vld [vmem:[%s1 + $0x160] sm:$0xf]
      %v264 = vld [vmem:[%s1 + $0x164] sm:$0xf]
      %v265 = vld [vmem:[%s1 + $0x168] sm:$0xf]
      %v266 = vld [vmem:[%s1 + $0x16c] sm:$0xf]
      %v267 = vld [vmem:[%s1 + $0x170] sm:$0xf]
      %v268 = vld [vmem:[%s1 + $0x174] sm:$0xf]
      %v269 = vld [vmem:[%s1 + $0x178] sm:$0xf]
      %v270 = vld [vmem:[%s1 + $0x17c] sm:$0xf]
      %v271 = vld [vmem:[%s1 + $0x180] sm:$0xf]
      %v272 = vld [vmem:[%s1 + $0x184] sm:$0xf]
      %v273 = vld [vmem:[%s1 + $0x188] sm:$0xf]
      %v274 = vld [vmem:[%s1 + $0x18c] sm:$0xf]
      %v275 = vld [vmem:[%s1 + $0x190] sm:$0xf]
      %v276 = vld [vmem:[%s1 + $0x194] sm:$0xf]
      %v277 = vld [vmem:[%s1 + $0x198] sm:$0xf]
      %v278 = vld [vmem:[%s1 + $0x19c] sm:$0xf]
      %v279 = vld [vmem:[%s1 + $0x1a0] sm:$0xf]
      %v280 = vld [vmem:[%s1 + $0x1a4] sm:$0xf]
      %v281 = vld [vmem:[%s1 + $0x1a8] sm:$0xf]
      %v282 = vld [vmem:[%s1 + $0x1ac] sm:$0xf]
      %v283 = vld [vmem:[%s1 + $0x1b0] sm:$0xf]
      %v284 = vld [vmem:[%s1 + $0x1b4] sm:$0xf]
      %v285 = vld [vmem:[%s1 + $0x1b8] sm:$0xf]
      %v286 = vld [vmem:[%s1 + $0x1bc] sm:$0xf]
      %v287 = vld [vmem:[%s1 + $0x1c0] sm:$0xf]
      %v288 = vld [vmem:[%s1 + $0x1c4] sm:$0xf]
      %v289 = vld [vmem:[%s1 + $0x1c8] sm:$0xf]
      %v290 = vld [vmem:[%s1 + $0x1cc] sm:$0xf]
      %v291 = vld [vmem:[%s1 + $0x1d0] sm:$0xf]
      %v292 = vld [vmem:[%s1 + $0x1d4] sm:$0xf]
      %v293 = vld [vmem:[%s1 + $0x1d8] sm:$0xf]
      %v294 = vld [vmem:[%s1 + $0x1dc] sm:$0xf]
      %v295 = vld [vmem:[%s1 + $0x1e0] sm:$0xf]
      %v296 = vld [vmem:[%s1 + $0x1e4] sm:$0xf]
      %v297 = vld [vmem:[%s1 + $0x1e8] sm:$0xf]
      %v298 = vld [vmem:[%s1 + $0x1ec] sm:$0xf]
      %v299 = vld [vmem:[%s1 + $0x1f0] sm:$0xf]
      %v300 = vld [vmem:[%s1 + $0x1f4] sm:$0xf]
      %v301 = vld [vmem:[%s1 + $0x1f8] sm:$0xf]
      %v302 = vld [vmem:[%s1 + $0x1fc] sm:$0xf]
      %v303 = vld [vmem:[%s1 + $0x200] sm:$0xf]
      %v304 = vld [vmem:[%s1 + $0x204] sm:$0xf]
      %v305 = vld [vmem:[%s1 + $0x208] sm:$0xf]
      %v306 = vld [vmem:[%s1 + $0x20c] sm:$0xf]
      %v307 = vld [vmem:[%s1 + $0x210] sm:$0xf]
      %v308 = vld [vmem:[%s1 + $0x214] sm:$0xf]
      %v309 = vld [vmem:[%s1 + $0x218] sm:$0xf]
      %v310 = vld [vmem:[%s1 + $0x21c] sm:$0xf]
      %v311 = vld [vmem:[%s1 + $0x220] sm:$0xf]
      %v312 = vld [vmem:[%s1 + $0x224] sm:$0xf]
      %v313 = vld [vmem:[%s1 + $0x228] sm:$0xf]
      %v314 = vld [vmem:[%s1 + $0x22c] sm:$0xf]
      %v315 = vld [vmem:[%s1 + $0x230] sm:$0xf]
      %v316 = vld [vmem:[%s1 + $0x234] sm:$0xf]
      %v317 = vld [vmem:[%s1 + $0x238] sm:$0xf]
      %v318 = vld [vmem:[%s1 + $0x23c] sm:$0xf]
      %v319 = vld [vmem:[%s1 + $0x240] sm:$0xf]
      %v320 = vld [vmem:[%s1 + $0x244] sm:$0xf]
      %v321 = vld [vmem:[%s1 + $0x248] sm:$0xf]
      %v322 = vld [vmem:[%s1 + $0x24c] sm:$0xf]
      %v323 = vld [vmem:[%s1 + $0x250] sm:$0xf]
      %v324 = vld [vmem:[%s1 + $0x254] sm:$0xf]
      %v325 = vld [vmem:[%s1 + $0x258] sm:$0xf]
      %v326 = vld [vmem:[%s1 + $0x25c] sm:$0xf]
      %v327 = vld [vmem:[%s1 + $0x260] sm:$0xf]
      %v328 = vld [vmem:[%s1 + $0x264] sm:$0xf]
      %v329 = vld [vmem:[%s1 + $0x268] sm:$0xf]
      %v330 = vld [vmem:[%s1 + $0x26c] sm:$0xf]
      %v331 = vld [vmem:[%s1 + $0x270] sm:$0xf]
      %v332 = vld [vmem:[%s1 + $0x274] sm:$0xf]
      %v333 = vld [vmem:[%s1 + $0x278] sm:$0xf]
      %v334 = vld [vmem:[%s1 + $0x27c] sm:$0xf]
      %v335 = vld [vmem:[%s1 + $0x280] sm:$0xf]
      %v336 = vld [vmem:[%s1 + $0x284] sm:$0xf]
      %v337 = vld [vmem:[%s1 + $0x288] sm:$0xf]
      %v338 = vld [vmem:[%s1 + $0x28c] sm:$0xf]
      %v339 = vld [vmem:[%s1 + $0x290] sm:$0xf]
      %v340 = vld [vmem:[%s1 + $0x294] sm:$0xf]
      %v341 = vld [vmem:[%s1 + $0x298] sm:$0xf]
      %v342 = vld [vmem:[%s1 + $0x29c] sm:$0xf]
      %v343 = vld [vmem:[%s1 + $0x2a0] sm:$0xf]
      %v344 = vld [vmem:[%s1 + $0x2a4] sm:$0xf]
      %v345 = vld [vmem:[%s1 + $0x2a8] sm:$0xf]
      %v346 = vld [vmem:[%s1 + $0x2ac] sm:$0xf]
      %v347 = vld [vmem:[%s1 + $0x2b0] sm:$0xf]
      %v348 = vld [vmem:[%s1 + $0x2b4] sm:$0xf]
      %v349 = vld [vmem:[%s1 + $0x2b8] sm:$0xf]
      %v350 = vld [vmem:[%s1 + $0x2bc] sm:$0xf]
      %v351 = vld [vmem:[%s1 + $0x2c0] sm:$0xf]
      %v352 = vld [vmem:[%s1 + $0x2c4] sm:$0xf]
      %v353 = vld [vmem:[%s1 + $0x2c8] sm:$0xf]
      %v354 = vld [vmem:[%s1 + $0x2cc] sm:$0xf]
      %v355 = vld [vmem:[%s1 + $0x2d0] sm:$0xf]
      %v356 = vld [vmem:[%s1 + $0x2d4] sm:$0xf]
      %v357 = vld [vmem:[%s1 + $0x2d8] sm:$0xf]
      %v358 = vld [vmem:[%s1 + $0x2dc] sm:$0xf]
      %v359 = vld [vmem:[%s1 + $0x2e0] sm:$0xf]
      %v360 = vld [vmem:[%s1 + $0x2e4] sm:$0xf]
      %v361 = vld [vmem:[%s1 + $0x2e8] sm:$0xf]
      %v362 = vld [vmem:[%s1 + $0x2ec] sm:$0xf]
      %v363 = vld [vmem:[%s1 + $0x2f0] sm:$0xf]
      %v364 = vld [vmem:[%s1 + $0x2f4] sm:$0xf]
      %v365 = vld [vmem:[%s1 + $0x2f8] sm:$0xf]
      %v366 = vld [vmem:[%s1 + $0x2fc] sm:$0xf]
      %v367 = vld [vmem:[%s1 + $0x300] sm:$0xf]
      %v368 = vld [vmem:[%s1 + $0x304] sm:$0xf]
      %v369 = vld [vmem:[%s1 + $0x308] sm:$0xf]
      %v370 = vld [vmem:[%s1 + $0x30c] sm:$0xf]
      %v371 = vld [vmem:[%s1 + $0x310] sm:$0xf]
      %v372 = vld [vmem:[%s1 + $0x314] sm:$0xf]
      %v373 = vld [vmem:[%s1 + $0x318] sm:$0xf]
      %v374 = vld [vmem:[%s1 + $0x31c] sm:$0xf]
      %v375 = vld [vmem:[%s1 + $0x320] sm:$0xf]
      %v376 = vld [vmem:[%s1 + $0x324] sm:$0xf]
      %v377 = vld [vmem:[%s1 + $0x328] sm:$0xf]
      %v378 = vld [vmem:[%s1 + $0x32c] sm:$0xf]
      %v379 = vld [vmem:[%s1 + $0x330] sm:$0xf]
      %v380 = vld [vmem:[%s1 + $0x334] sm:$0xf]
      %v381 = vld [vmem:[%s1 + $0x338] sm:$0xf]
      %v382 = vld [vmem:[%s1 + $0x33c] sm:$0xf]
      %v383 = vld [vmem:[%s1 + $0x340] sm:$0xf]
      %v384 = vld [vmem:[%s1 + $0x344] sm:$0xf]
      %v385 = vld [vmem:[%s1 + $0x348] sm:$0xf]
      %v386 = vld [vmem:[%s1 + $0x34c] sm:$0xf]
      %v387 = vld [vmem:[%s1 + $0x350] sm:$0xf]
      %v388 = vld [vmem:[%s1 + $0x354] sm:$0xf]
      %v389 = vld [vmem:[%s1 + $0x358] sm:$0xf]
      %v390 = vld [vmem:[%s1 + $0x35c] sm:$0xf]
      %v391 = vld [vmem:[%s1 + $0x360] sm:$0xf]
      %v392 = vld [vmem:[%s1 + $0x364] sm:$0xf]
      %v393 = vld [vmem:[%s1 + $0x368] sm:$0xf]
      %v394 = vld [vmem:[%s1 + $0x36c] sm:$0xf]
      %v395 = vld [vmem:[%s1 + $0x370] sm:$0xf]
      %v396 = vld [vmem:[%s1 + $0x374] sm:$0xf]
      %v397 = vld [vmem:[%s1 + $0x378] sm:$0xf]
      %v398 = vld [vmem:[%s1 + $0x37c] sm:$0xf]
      %v399 = vld [vmem:[%s2] sm:$0x1]
      %v401 = vlaneseq
      %v402 = vshrl.u32 %v401, 7
      %v403 = vsub.s32 0, %v402
      %v404 = vrot.slane %v399, %v403
      %v413 = vunpack.c.l.b16 %v168
      %v414 = vunpack.c.h.b16 %v168
      %v415 = vunpack.c.l.b16 %v169
      %v416 = vunpack.c.h.b16 %v169
      %v417 = vunpack.c.l.b16 %v170
      %v418 = vunpack.c.h.b16 %v170
      %v419 = vunpack.c.l.b16 %v171
      %v420 = vunpack.c.h.b16 %v171
      %v421 = vunpack.c.l.b16 %v172
      %v422 = vunpack.c.h.b16 %v172
      %v423 = vunpack.c.l.b16 %v173
      %v424 = vunpack.c.h.b16 %v173
      %v425 = vunpack.c.l.b16 %v174
      %v426 = vunpack.c.h.b16 %v174
      %v427 = vpack.c.b16 %v413, %v413
      %v428 = vpack.c.b16 %v414, %v414
      %v429 = vpack.c.b16 %v415, %v415
      %v430 = vpack.c.b16 %v416, %v416
      %v431 = vpack.c.b16 %v417, %v417
      %v432 = vpack.c.b16 %v418, %v418
      %v433 = vpack.c.b16 %v419, %v419
      %v434 = vpack.c.b16 %v420, %v420
      %v435 = vpack.c.b16 %v421, %v421
      %v436 = vpack.c.b16 %v422, %v422
      %v437 = vpack.c.b16 %v423, %v423
      %v438 = vpack.c.b16 %v424, %v424
      %v439 = vpack.c.b16 %v425, %v425
      %v440 = vpack.c.b16 %v426, %v426
      %v679 = vunpack.c.l.b16 %v175
      %v680 = vunpack.c.l.b16 %v176
      %v681 = vunpack.c.l.b16 %v177
      %v682 = vunpack.c.l.b16 %v178
      %v683 = vunpack.c.l.b16 %v179
      %v684 = vunpack.c.l.b16 %v180
      %v685 = vunpack.c.l.b16 %v181
      %v686 = vunpack.c.l.b16 %v182
      %v687 = vunpack.c.l.b16 %v183
      %v688 = vunpack.c.l.b16 %v184
      %v689 = vunpack.c.l.b16 %v185
      %v690 = vunpack.c.l.b16 %v186
      %v691 = vunpack.c.l.b16 %v187
      %v692 = vunpack.c.l.b16 %v188
      %v693 = vunpack.c.l.b16 %v189
      %v694 = vunpack.c.l.b16 %v190
      %v695 = vunpack.c.l.b16 %v191
      %v696 = vunpack.c.l.b16 %v192
      %v697 = vunpack.c.l.b16 %v193
      %v698 = vunpack.c.l.b16 %v194
      %v699 = vunpack.c.l.b16 %v195
      %v700 = vunpack.c.l.b16 %v196
      %v701 = vunpack.c.l.b16 %v197
      %v702 = vunpack.c.l.b16 %v198
      %v703 = vunpack.c.l.b16 %v199
      %v704 = vunpack.c.l.b16 %v200
      %v705 = vunpack.c.l.b16 %v201
      %v706 = vunpack.c.l.b16 %v202
      %v707 = vunpack.c.l.b16 %v203
      %v708 = vunpack.c.l.b16 %v204
      %v709 = vunpack.c.l.b16 %v205
      %v710 = vunpack.c.l.b16 %v206
      %v711 = vunpack.c.l.b16 %v207
      %v712 = vunpack.c.l.b16 %v208
      %v713 = vunpack.c.l.b16 %v209
      %v714 = vunpack.c.l.b16 %v210
      %v715 = vunpack.c.l.b16 %v211
      %v716 = vunpack.c.l.b16 %v212
      %v717 = vunpack.c.l.b16 %v213
      %v718 = vunpack.c.l.b16 %v214
      %v719 = vunpack.c.l.b16 %v215
      %v720 = vunpack.c.l.b16 %v216
      %v721 = vunpack.c.l.b16 %v217
      %v722 = vunpack.c.l.b16 %v218
      %v723 = vunpack.c.l.b16 %v219
      %v724 = vunpack.c.l.b16 %v220
      %v725 = vunpack.c.l.b16 %v221
      %v726 = vunpack.c.l.b16 %v222
      %v727 = vunpack.c.l.b16 %v223
      %v728 = vunpack.c.l.b16 %v224
      %v729 = vunpack.c.l.b16 %v225
      %v730 = vunpack.c.l.b16 %v226
      %v731 = vunpack.c.l.b16 %v227
      %v732 = vunpack.c.l.b16 %v228
      %v733 = vunpack.c.l.b16 %v229
      %v734 = vunpack.c.l.b16 %v230
      %v735 = vunpack.c.l.b16 %v231
      %v736 = vunpack.c.l.b16 %v232
      %v737 = vunpack.c.l.b16 %v233
      %v738 = vunpack.c.l.b16 %v234
      %v739 = vunpack.c.l.b16 %v235
      %v740 = vunpack.c.l.b16 %v236
      %v741 = vunpack.c.l.b16 %v237
      %v742 = vunpack.c.l.b16 %v238
      %v743 = vunpack.c.l.b16 %v239
      %v744 = vunpack.c.l.b16 %v240
      %v745 = vunpack.c.l.b16 %v241
      %v746 = vunpack.c.l.b16 %v242
      %v747 = vunpack.c.l.b16 %v243
      %v748 = vunpack.c.l.b16 %v244
      %v749 = vunpack.c.l.b16 %v245
      %v750 = vunpack.c.l.b16 %v246
      %v751 = vunpack.c.l.b16 %v247
      %v752 = vunpack.c.l.b16 %v248
      %v753 = vunpack.c.l.b16 %v249
      %v754 = vunpack.c.l.b16 %v250
      %v755 = vunpack.c.l.b16 %v251
      %v756 = vunpack.c.l.b16 %v252
      %v757 = vunpack.c.l.b16 %v253
      %v758 = vunpack.c.l.b16 %v254
      %v759 = vunpack.c.l.b16 %v255
      %v760 = vunpack.c.l.b16 %v256
      %v761 = vunpack.c.l.b16 %v257
      %v762 = vunpack.c.l.b16 %v258
      %v763 = vunpack.c.l.b16 %v259
      %v764 = vunpack.c.l.b16 %v260
      %v765 = vunpack.c.l.b16 %v261
      %v766 = vunpack.c.l.b16 %v262
      %v767 = vunpack.c.l.b16 %v263
      %v768 = vunpack.c.l.b16 %v264
      %v769 = vunpack.c.l.b16 %v265
      %v770 = vunpack.c.l.b16 %v266
      %v771 = vunpack.c.l.b16 %v267
      %v772 = vunpack.c.l.b16 %v268
      %v773 = vunpack.c.l.b16 %v269
      %v774 = vunpack.c.l.b16 %v270
      %v775 = vunpack.c.l.b16 %v271
      %v776 = vunpack.c.l.b16 %v272
      %v777 = vunpack.c.l.b16 %v273
      %v778 = vunpack.c.l.b16 %v274
      %v779 = vunpack.c.l.b16 %v275
      %v780 = vunpack.c.l.b16 %v276
      %v781 = vunpack.c.l.b16 %v277
      %v782 = vunpack.c.l.b16 %v278
      %v783 = vunpack.c.l.b16 %v279
      %v784 = vunpack.c.l.b16 %v280
      %v785 = vunpack.c.l.b16 %v281
      %v786 = vunpack.c.l.b16 %v282
      %v787 = vunpack.c.l.b16 %v283
      %v788 = vunpack.c.l.b16 %v284
      %v789 = vunpack.c.l.b16 %v285
      %v790 = vunpack.c.l.b16 %v286
      %v791 = vunpack.c.l.b16 %v287
      %v792 = vunpack.c.l.b16 %v288
      %v793 = vunpack.c.l.b16 %v289
      %v794 = vunpack.c.l.b16 %v290
      %v795 = vunpack.c.l.b16 %v291
      %v796 = vunpack.c.l.b16 %v292
      %v797 = vunpack.c.l.b16 %v293
      %v798 = vunpack.c.l.b16 %v294
      %v799 = vunpack.c.l.b16 %v295
      %v800 = vunpack.c.l.b16 %v296
      %v801 = vunpack.c.l.b16 %v297
      %v802 = vunpack.c.l.b16 %v298
      %v803 = vunpack.c.l.b16 %v299
      %v804 = vunpack.c.l.b16 %v300
      %v805 = vunpack.c.l.b16 %v301
      %v806 = vunpack.c.l.b16 %v302
      %v807 = vunpack.c.l.b16 %v303
      %v808 = vunpack.c.l.b16 %v304
      %v809 = vunpack.c.l.b16 %v305
      %v810 = vunpack.c.l.b16 %v306
      %v811 = vunpack.c.l.b16 %v307
      %v812 = vunpack.c.l.b16 %v308
      %v813 = vunpack.c.l.b16 %v309
      %v814 = vunpack.c.l.b16 %v310
      %v815 = vunpack.c.l.b16 %v311
      %v816 = vunpack.c.l.b16 %v312
      %v817 = vunpack.c.l.b16 %v313
      %v818 = vunpack.c.l.b16 %v314
      %v819 = vunpack.c.l.b16 %v315
      %v820 = vunpack.c.l.b16 %v316
      %v821 = vunpack.c.l.b16 %v317
      %v822 = vunpack.c.l.b16 %v318
      %v823 = vunpack.c.l.b16 %v319
      %v824 = vunpack.c.l.b16 %v320
      %v825 = vunpack.c.l.b16 %v321
      %v826 = vunpack.c.l.b16 %v322
      %v827 = vunpack.c.l.b16 %v323
      %v828 = vunpack.c.l.b16 %v324
      %v829 = vunpack.c.l.b16 %v325
      %v830 = vunpack.c.l.b16 %v326
      %v831 = vunpack.c.l.b16 %v327
      %v832 = vunpack.c.l.b16 %v328
      %v833 = vunpack.c.l.b16 %v329
      %v834 = vunpack.c.l.b16 %v330
      %v835 = vunpack.c.l.b16 %v331
      %v836 = vunpack.c.l.b16 %v332
      %v837 = vunpack.c.l.b16 %v333
      %v838 = vunpack.c.l.b16 %v334
      %v839 = vunpack.c.l.b16 %v335
      %v840 = vunpack.c.l.b16 %v336
      %v841 = vunpack.c.l.b16 %v337
      %v842 = vunpack.c.l.b16 %v338
      %v843 = vunpack.c.l.b16 %v339
      %v844 = vunpack.c.l.b16 %v340
      %v845 = vunpack.c.l.b16 %v341
      %v846 = vunpack.c.l.b16 %v342
      %v847 = vunpack.c.l.b16 %v343
      %v848 = vunpack.c.l.b16 %v344
      %v849 = vunpack.c.l.b16 %v345
      %v850 = vunpack.c.l.b16 %v346
      %v851 = vunpack.c.l.b16 %v347
      %v852 = vunpack.c.l.b16 %v348
      %v853 = vunpack.c.l.b16 %v349
      %v854 = vunpack.c.l.b16 %v350
      %v855 = vunpack.c.l.b16 %v351
      %v856 = vunpack.c.l.b16 %v352
      %v857 = vunpack.c.l.b16 %v353
      %v858 = vunpack.c.l.b16 %v354
      %v859 = vunpack.c.l.b16 %v355
      %v860 = vunpack.c.l.b16 %v356
      %v861 = vunpack.c.l.b16 %v357
      %v862 = vunpack.c.l.b16 %v358
      %v863 = vunpack.c.l.b16 %v359
      %v864 = vunpack.c.l.b16 %v360
      %v865 = vunpack.c.l.b16 %v361
      %v866 = vunpack.c.l.b16 %v362
      %v867 = vunpack.c.l.b16 %v363
      %v868 = vunpack.c.l.b16 %v364
      %v869 = vunpack.c.l.b16 %v365
      %v870 = vunpack.c.l.b16 %v366
      %v871 = vunpack.c.l.b16 %v367
      %v872 = vunpack.c.l.b16 %v368
      %v873 = vunpack.c.l.b16 %v369
      %v874 = vunpack.c.l.b16 %v370
      %v875 = vunpack.c.l.b16 %v371
      %v876 = vunpack.c.l.b16 %v372
      %v877 = vunpack.c.l.b16 %v373
      %v878 = vunpack.c.l.b16 %v374
      %v879 = vunpack.c.l.b16 %v375
      %v880 = vunpack.c.l.b16 %v376
      %v881 = vunpack.c.l.b16 %v377
      %v882 = vunpack.c.l.b16 %v378
      %v883 = vunpack.c.l.b16 %v379
      %v884 = vunpack.c.l.b16 %v380
      %v885 = vunpack.c.l.b16 %v381
      %v886 = vunpack.c.l.b16 %v382
      %v887 = vunpack.c.l.b16 %v383
      %v888 = vunpack.c.l.b16 %v384
      %v889 = vunpack.c.l.b16 %v385
      %v890 = vunpack.c.l.b16 %v386
      %v891 = vunpack.c.l.b16 %v387
      %v892 = vunpack.c.l.b16 %v388
      %v893 = vunpack.c.l.b16 %v389
      %v894 = vunpack.c.l.b16 %v390
      %v895 = vunpack.c.l.b16 %v391
      %v896 = vunpack.c.l.b16 %v392
      %v897 = vunpack.c.l.b16 %v393
      %v898 = vunpack.c.l.b16 %v394
      %v899 = vunpack.c.l.b16 %v395
      %v900 = vunpack.c.l.b16 %v396
      %v901 = vunpack.c.l.b16 %v397
      %v902 = vunpack.c.l.b16 %v398
      %v903 = vpack.c.b16 %v680, %v679
      %v904 = vpack.c.b16 %v682, %v681
      %v905 = vpack.c.b16 %v684, %v683
      %v906 = vpack.c.b16 %v686, %v685
      %v907 = vpack.c.b16 %v688, %v687
      %v908 = vpack.c.b16 %v690, %v689
      %v909 = vpack.c.b16 %v692, %v691
      %v910 = vpack.c.b16 %v694, %v693
      %v911 = vpack.c.b16 %v696, %v695
      %v912 = vpack.c.b16 %v698, %v697
      %v913 = vpack.c.b16 %v700, %v699
      %v914 = vpack.c.b16 %v702, %v701
      %v915 = vpack.c.b16 %v704, %v703
      %v916 = vpack.c.b16 %v706, %v705
      %v917 = vpack.c.b16 %v708, %v707
      %v918 = vpack.c.b16 %v710, %v709
      %v919 = vpack.c.b16 %v712, %v711
      %v920 = vpack.c.b16 %v714, %v713
      %v921 = vpack.c.b16 %v716, %v715
      %v922 = vpack.c.b16 %v718, %v717
      %v923 = vpack.c.b16 %v720, %v719
      %v924 = vpack.c.b16 %v722, %v721
      %v925 = vpack.c.b16 %v724, %v723
      %v926 = vpack.c.b16 %v726, %v725
      %v927 = vpack.c.b16 %v728, %v727
      %v928 = vpack.c.b16 %v730, %v729
      %v929 = vpack.c.b16 %v732, %v731
      %v930 = vpack.c.b16 %v734, %v733
      %v931 = vpack.c.b16 %v736, %v735
      %v932 = vpack.c.b16 %v738, %v737
      %v933 = vpack.c.b16 %v740, %v739
      %v934 = vpack.c.b16 %v742, %v741
      %v935 = vpack.c.b16 %v744, %v743
      %v936 = vpack.c.b16 %v746, %v745
      %v937 = vpack.c.b16 %v748, %v747
      %v938 = vpack.c.b16 %v750, %v749
      %v939 = vpack.c.b16 %v752, %v751
      %v940 = vpack.c.b16 %v754, %v753
      %v941 = vpack.c.b16 %v756, %v755
      %v942 = vpack.c.b16 %v758, %v757
      %v943 = vpack.c.b16 %v760, %v759
      %v944 = vpack.c.b16 %v762, %v761
      %v945 = vpack.c.b16 %v764, %v763
      %v946 = vpack.c.b16 %v766, %v765
      %v947 = vpack.c.b16 %v768, %v767
      %v948 = vpack.c.b16 %v770, %v769
      %v949 = vpack.c.b16 %v772, %v771
      %v950 = vpack.c.b16 %v774, %v773
      %v951 = vpack.c.b16 %v776, %v775
      %v952 = vpack.c.b16 %v778, %v777
      %v953 = vpack.c.b16 %v780, %v779
      %v954 = vpack.c.b16 %v782, %v781
      %v955 = vpack.c.b16 %v784, %v783
      %v956 = vpack.c.b16 %v786, %v785
      %v957 = vpack.c.b16 %v788, %v787
      %v958 = vpack.c.b16 %v790, %v789
      %v959 = vpack.c.b16 %v792, %v791
      %v960 = vpack.c.b16 %v794, %v793
      %v961 = vpack.c.b16 %v796, %v795
      %v962 = vpack.c.b16 %v798, %v797
      %v963 = vpack.c.b16 %v800, %v799
      %v964 = vpack.c.b16 %v802, %v801
      %v965 = vpack.c.b16 %v804, %v803
      %v966 = vpack.c.b16 %v806, %v805
      %v967 = vpack.c.b16 %v808, %v807
      %v968 = vpack.c.b16 %v810, %v809
      %v969 = vpack.c.b16 %v812, %v811
      %v970 = vpack.c.b16 %v814, %v813
      %v971 = vpack.c.b16 %v816, %v815
      %v972 = vpack.c.b16 %v818, %v817
      %v973 = vpack.c.b16 %v820, %v819
      %v974 = vpack.c.b16 %v822, %v821
      %v975 = vpack.c.b16 %v824, %v823
      %v976 = vpack.c.b16 %v826, %v825
      %v977 = vpack.c.b16 %v828, %v827
      %v978 = vpack.c.b16 %v830, %v829
      %v979 = vpack.c.b16 %v832, %v831
      %v980 = vpack.c.b16 %v834, %v833
      %v981 = vpack.c.b16 %v836, %v835
      %v982 = vpack.c.b16 %v838, %v837
      %v983 = vpack.c.b16 %v840, %v839
      %v984 = vpack.c.b16 %v842, %v841
      %v985 = vpack.c.b16 %v844, %v843
      %v986 = vpack.c.b16 %v846, %v845
      %v987 = vpack.c.b16 %v848, %v847
      %v988 = vpack.c.b16 %v850, %v849
      %v989 = vpack.c.b16 %v852, %v851
      %v990 = vpack.c.b16 %v854, %v853
      %v991 = vpack.c.b16 %v856, %v855
      %v992 = vpack.c.b16 %v858, %v857
      %v993 = vpack.c.b16 %v860, %v859
      %v994 = vpack.c.b16 %v862, %v861
      %v995 = vpack.c.b16 %v864, %v863
      %v996 = vpack.c.b16 %v866, %v865
      %v997 = vpack.c.b16 %v868, %v867
      %v998 = vpack.c.b16 %v870, %v869
      %v999 = vpack.c.b16 %v872, %v871
      %v1000 = vpack.c.b16 %v874, %v873
      %v1001 = vpack.c.b16 %v876, %v875
      %v1002 = vpack.c.b16 %v878, %v877
      %v1003 = vpack.c.b16 %v880, %v879
      %v1004 = vpack.c.b16 %v882, %v881
      %v1005 = vpack.c.b16 %v884, %v883
      %v1006 = vpack.c.b16 %v886, %v885
      %v1007 = vpack.c.b16 %v888, %v887
      %v1008 = vpack.c.b16 %v890, %v889
      %v1009 = vpack.c.b16 %v892, %v891
      %v1010 = vpack.c.b16 %v894, %v893
      %v1011 = vpack.c.b16 %v896, %v895
      %v1012 = vpack.c.b16 %v898, %v897
      %v1013 = vpack.c.b16 %v900, %v899
      %v1014 = vpack.c.b16 %v902, %v901
      %1127 = vmatprep.subr.bf16.mxu0 0
      %1128 = vmatpush1.bf16.msra.mxu0 %v903
      %1129 = vmatprep.subr.bf16.mxu0 0
      %1130 = vmatpush1.bf16.msra.mxu0 %v904
      %1131 = vmatprep.subr.bf16.mxu0 0
      %1132 = vmatpush1.bf16.msra.mxu0 %v905
      %1133 = vmatprep.subr.bf16.mxu0 0
      %1134 = vmatpush1.bf16.msra.mxu0 %v906
      %1135 = vmatprep.subr.bf16.mxu0 0
      %1136 = vmatpush1.bf16.msra.mxu0 %v907
      %1137 = vmatprep.subr.bf16.mxu0 0
      %1138 = vmatpush1.bf16.msra.mxu0 %v908
      %1139 = vmatprep.subr.bf16.mxu0 0
      %1140 = vmatpush1.bf16.msra.mxu0 %v909
      %1141 = vmatprep.subr.bf16.mxu0 0
      %1142 = vmatpush1.bf16.msra.mxu0 %v910
      %1143 = vmatprep.subr.bf16.mxu0 0
      %1144 = vmatpush1.bf16.msra.mxu0 %v911
      %1145 = vmatprep.subr.bf16.mxu0 0
      %1146 = vmatpush1.bf16.msra.mxu0 %v912
      %1147 = vmatprep.subr.bf16.mxu0 0
      %1148 = vmatpush1.bf16.msra.mxu0 %v913
      %1149 = vmatprep.subr.bf16.mxu0 0
      %1150 = vmatpush1.bf16.msra.mxu0 %v914
      %1151 = vmatprep.subr.bf16.mxu0 0
      %1152 = vmatpush1.bf16.msra.mxu0 %v915
      %1153 = vmatprep.subr.bf16.mxu0 0
      %1154 = vmatpush1.bf16.msra.mxu0 %v916
      %1155 = vmatprep.subr.bf16.mxu0 0
      %1156 = vmatpush1.bf16.msra.mxu0 %v917
      %1157 = vmatprep.subr.bf16.mxu0 0
      %1158 = vmatpush1.bf16.msra.mxu0 %v918
      %1159 = vmatprep.mubr.bf16.mxu0 %v428
      %1160 = vmatmul.mubr.bf16.gmra.mrb[0].mxu0 %v427
      %v1161 = vpop.f32.mrb[0].mxu0
      %v1162 = vadd.f32 %v404, %v1161
      %v1163 = vpop.f32.mrb[0].mxu0
      %v1164 = vpop.f32.mrb[0].mxu0
      %v1165 = vpop.f32.mrb[0].mxu0
      %1166 = vdwg.mxu0
      %1167 = vmatprep.subr.bf16.mxu0 0
      %1168 = vmatpush1.bf16.msra.mxu0 %v919
      %1169 = vmatprep.subr.bf16.mxu0 0
      %1170 = vmatpush1.bf16.msra.mxu0 %v920
      %1171 = vmatprep.subr.bf16.mxu0 0
      %1172 = vmatpush1.bf16.msra.mxu0 %v921
      %1173 = vmatprep.subr.bf16.mxu0 0
      %1174 = vmatpush1.bf16.msra.mxu0 %v922
      %1175 = vmatprep.subr.bf16.mxu0 0
      %1176 = vmatpush1.bf16.msra.mxu0 %v923
      %1177 = vmatprep.subr.bf16.mxu0 0
      %1178 = vmatpush1.bf16.msra.mxu0 %v924
      %1179 = vmatprep.subr.bf16.mxu0 0
      %1180 = vmatpush1.bf16.msra.mxu0 %v925
      %1181 = vmatprep.subr.bf16.mxu0 0
      %1182 = vmatpush1.bf16.msra.mxu0 %v926
      %1183 = vmatprep.subr.bf16.mxu0 0
      %1184 = vmatpush1.bf16.msra.mxu0 %v927
      %1185 = vmatprep.subr.bf16.mxu0 0
      %1186 = vmatpush1.bf16.msra.mxu0 %v928
      %1187 = vmatprep.subr.bf16.mxu0 0
      %1188 = vmatpush1.bf16.msra.mxu0 %v929
      %1189 = vmatprep.subr.bf16.mxu0 0
      %1190 = vmatpush1.bf16.msra.mxu0 %v930
      %1191 = vmatprep.subr.bf16.mxu0 0
      %1192 = vmatpush1.bf16.msra.mxu0 %v931
      %1193 = vmatprep.subr.bf16.mxu0 0
      %1194 = vmatpush1.bf16.msra.mxu0 %v932
      %1195 = vmatprep.subr.bf16.mxu0 0
      %1196 = vmatpush1.bf16.msra.mxu0 %v933
      %1197 = vmatprep.subr.bf16.mxu0 0
      %1198 = vmatpush1.bf16.msra.mxu0 %v934
      %1199 = vmatprep.mubr.bf16.mxu0 %v430
      %1200 = vmatmul.mubr.bf16.gmra.mrb[0].mxu0 %v429
      %v1201 = vpop.f32.mrb[0].mxu0
      %v1202 = vadd.f32 %v1162, %v1201
      %v1203 = vpop.f32.mrb[0].mxu0
      %v1204 = vpop.f32.mrb[0].mxu0
      %v1205 = vpop.f32.mrb[0].mxu0
      %1206 = vdwg.mxu0
      %1207 = vmatprep.subr.bf16.mxu0 0
      %1208 = vmatpush1.bf16.msra.mxu0 %v935
      %1209 = vmatprep.subr.bf16.mxu0 0
      %1210 = vmatpush1.bf16.msra.mxu0 %v936
      %1211 = vmatprep.subr.bf16.mxu0 0
      %1212 = vmatpush1.bf16.msra.mxu0 %v937
      %1213 = vmatprep.subr.bf16.mxu0 0
      %1214 = vmatpush1.bf16.msra.mxu0 %v938
      %1215 = vmatprep.subr.bf16.mxu0 0
      %1216 = vmatpush1.bf16.msra.mxu0 %v939
      %1217 = vmatprep.subr.bf16.mxu0 0
      %1218 = vmatpush1.bf16.msra.mxu0 %v940
      %1219 = vmatprep.subr.bf16.mxu0 0
      %1220 = vmatpush1.bf16.msra.mxu0 %v941
      %1221 = vmatprep.subr.bf16.mxu0 0
      %1222 = vmatpush1.bf16.msra.mxu0 %v942
      %1223 = vmatprep.subr.bf16.mxu0 0
      %1224 = vmatpush1.bf16.msra.mxu0 %v943
      %1225 = vmatprep.subr.bf16.mxu0 0
      %1226 = vmatpush1.bf16.msra.mxu0 %v944
      %1227 = vmatprep.subr.bf16.mxu0 0
      %1228 = vmatpush1.bf16.msra.mxu0 %v945
      %1229 = vmatprep.subr.bf16.mxu0 0
      %1230 = vmatpush1.bf16.msra.mxu0 %v946
      %1231 = vmatprep.subr.bf16.mxu0 0
      %1232 = vmatpush1.bf16.msra.mxu0 %v947
      %1233 = vmatprep.subr.bf16.mxu0 0
      %1234 = vmatpush1.bf16.msra.mxu0 %v948
      %1235 = vmatprep.subr.bf16.mxu0 0
      %1236 = vmatpush1.bf16.msra.mxu0 %v949
      %1237 = vmatprep.subr.bf16.mxu0 0
      %1238 = vmatpush1.bf16.msra.mxu0 %v950
      %1239 = vmatprep.mubr.bf16.mxu0 %v432
      %1240 = vmatmul.mubr.bf16.gmra.mrb[0].mxu0 %v431
      %v1241 = vpop.f32.mrb[0].mxu0
      %v1242 = vadd.f32 %v1202, %v1241
      %v1243 = vpop.f32.mrb[0].mxu0
      %v1244 = vpop.f32.mrb[0].mxu0
      %v1245 = vpop.f32.mrb[0].mxu0
      %1246 = vdwg.mxu0
      %1247 = vmatprep.subr.bf16.mxu0 0
      %1248 = vmatpush1.bf16.msra.mxu0 %v951
      %1249 = vmatprep.subr.bf16.mxu0 0
      %1250 = vmatpush1.bf16.msra.mxu0 %v952
      %1251 = vmatprep.subr.bf16.mxu0 0
      %1252 = vmatpush1.bf16.msra.mxu0 %v953
      %1253 = vmatprep.subr.bf16.mxu0 0
      %1254 = vmatpush1.bf16.msra.mxu0 %v954
      %1255 = vmatprep.subr.bf16.mxu0 0
      %1256 = vmatpush1.bf16.msra.mxu0 %v955
      %1257 = vmatprep.subr.bf16.mxu0 0
      %1258 = vmatpush1.bf16.msra.mxu0 %v956
      %1259 = vmatprep.subr.bf16.mxu0 0
      %1260 = vmatpush1.bf16.msra.mxu0 %v957
      %1261 = vmatprep.subr.bf16.mxu0 0
      %1262 = vmatpush1.bf16.msra.mxu0 %v958
      %1263 = vmatprep.subr.bf16.mxu0 0
      %1264 = vmatpush1.bf16.msra.mxu0 %v959
      %1265 = vmatprep.subr.bf16.mxu0 0
      %1266 = vmatpush1.bf16.msra.mxu0 %v960
      %1267 = vmatprep.subr.bf16.mxu0 0
      %1268 = vmatpush1.bf16.msra.mxu0 %v961
      %1269 = vmatprep.subr.bf16.mxu0 0
      %1270 = vmatpush1.bf16.msra.mxu0 %v962
      %1271 = vmatprep.subr.bf16.mxu0 0
      %1272 = vmatpush1.bf16.msra.mxu0 %v963
      %1273 = vmatprep.subr.bf16.mxu0 0
      %1274 = vmatpush1.bf16.msra.mxu0 %v964
      %1275 = vmatprep.subr.bf16.mxu0 0
      %1276 = vmatpush1.bf16.msra.mxu0 %v965
      %1277 = vmatprep.subr.bf16.mxu0 0
      %1278 = vmatpush1.bf16.msra.mxu0 %v966
      %1279 = vmatprep.mubr.bf16.mxu0 %v434
      %1280 = vmatmul.mubr.bf16.gmra.mrb[0].mxu0 %v433
      %v1281 = vpop.f32.mrb[0].mxu0
      %v1282 = vadd.f32 %v1242, %v1281
      %v1283 = vpop.f32.mrb[0].mxu0
      %v1284 = vpop.f32.mrb[0].mxu0
      %v1285 = vpop.f32.mrb[0].mxu0
      %1286 = vdwg.mxu0
      %1287 = vmatprep.subr.bf16.mxu0 0
      %1288 = vmatpush1.bf16.msra.mxu0 %v967
      %1289 = vmatprep.subr.bf16.mxu0 0
      %1290 = vmatpush1.bf16.msra.mxu0 %v968
      %1291 = vmatprep.subr.bf16.mxu0 0
      %1292 = vmatpush1.bf16.msra.mxu0 %v969
      %1293 = vmatprep.subr.bf16.mxu0 0
      %1294 = vmatpush1.bf16.msra.mxu0 %v970
      %1295 = vmatprep.subr.bf16.mxu0 0
      %1296 = vmatpush1.bf16.msra.mxu0 %v971
      %1297 = vmatprep.subr.bf16.mxu0 0
      %1298 = vmatpush1.bf16.msra.mxu0 %v972
      %1299 = vmatprep.subr.bf16.mxu0 0
      %1300 = vmatpush1.bf16.msra.mxu0 %v973
      %1301 = vmatprep.subr.bf16.mxu0 0
      %1302 = vmatpush1.bf16.msra.mxu0 %v974
      %1303 = vmatprep.subr.bf16.mxu0 0
      %1304 = vmatpush1.bf16.msra.mxu0 %v975
      %1305 = vmatprep.subr.bf16.mxu0 0
      %1306 = vmatpush1.bf16.msra.mxu0 %v976
      %1307 = vmatprep.subr.bf16.mxu0 0
      %1308 = vmatpush1.bf16.msra.mxu0 %v977
      %1309 = vmatprep.subr.bf16.mxu0 0
      %1310 = vmatpush1.bf16.msra.mxu0 %v978
      %1311 = vmatprep.subr.bf16.mxu0 0
      %1312 = vmatpush1.bf16.msra.mxu0 %v979
      %1313 = vmatprep.subr.bf16.mxu0 0
      %1314 = vmatpush1.bf16.msra.mxu0 %v980
      %1315 = vmatprep.subr.bf16.mxu0 0
      %1316 = vmatpush1.bf16.msra.mxu0 %v981
      %1317 = vmatprep.subr.bf16.mxu0 0
      %1318 = vmatpush1.bf16.msra.mxu0 %v982
      %1319 = vmatprep.mubr.bf16.mxu0 %v436
      %1320 = vmatmul.mubr.bf16.gmra.mrb[0].mxu0 %v435
      %v1321 = vpop.f32.mrb[0].mxu0
      %v1322 = vadd.f32 %v1282, %v1321
      %v1323 = vpop.f32.mrb[0].mxu0
      %v1324 = vpop.f32.mrb[0].mxu0
      %v1325 = vpop.f32.mrb[0].mxu0
      %1326 = vdwg.mxu0
      %1327 = vmatprep.subr.bf16.mxu0 0
      %1328 = vmatpush1.bf16.msra.mxu0 %v983
      %1329 = vmatprep.subr.bf16.mxu0 0
      %1330 = vmatpush1.bf16.msra.mxu0 %v984
      %1331 = vmatprep.subr.bf16.mxu0 0
      %1332 = vmatpush1.bf16.msra.mxu0 %v985
      %1333 = vmatprep.subr.bf16.mxu0 0
      %1334 = vmatpush1.bf16.msra.mxu0 %v986
      %1335 = vmatprep.subr.bf16.mxu0 0
      %1336 = vmatpush1.bf16.msra.mxu0 %v987
      %1337 = vmatprep.subr.bf16.mxu0 0
      %1338 = vmatpush1.bf16.msra.mxu0 %v988
      %1339 = vmatprep.subr.bf16.mxu0 0
      %1340 = vmatpush1.bf16.msra.mxu0 %v989
      %1341 = vmatprep.subr.bf16.mxu0 0
      %1342 = vmatpush1.bf16.msra.mxu0 %v990
      %1343 = vmatprep.subr.bf16.mxu0 0
      %1344 = vmatpush1.bf16.msra.mxu0 %v991
      %1345 = vmatprep.subr.bf16.mxu0 0
      %1346 = vmatpush1.bf16.msra.mxu0 %v992
      %1347 = vmatprep.subr.bf16.mxu0 0
      %1348 = vmatpush1.bf16.msra.mxu0 %v993
      %1349 = vmatprep.subr.bf16.mxu0 0
      %1350 = vmatpush1.bf16.msra.mxu0 %v994
      %1351 = vmatprep.subr.bf16.mxu0 0
      %1352 = vmatpush1.bf16.msra.mxu0 %v995
      %1353 = vmatprep.subr.bf16.mxu0 0
      %1354 = vmatpush1.bf16.msra.mxu0 %v996
      %1355 = vmatprep.subr.bf16.mxu0 0
      %1356 = vmatpush1.bf16.msra.mxu0 %v997
      %1357 = vmatprep.subr.bf16.mxu0 0
      %1358 = vmatpush1.bf16.msra.mxu0 %v998
      %1359 = vmatprep.mubr.bf16.mxu0 %v438
      %1360 = vmatmul.mubr.bf16.gmra.mrb[0].mxu0 %v437
      %v1361 = vpop.f32.mrb[0].mxu0
      %v1362 = vadd.f32 %v1322, %v1361
      %v1363 = vpop.f32.mrb[0].mxu0
      %v1364 = vpop.f32.mrb[0].mxu0
      %v1365 = vpop.f32.mrb[0].mxu0
      %1366 = vdwg.mxu0
      %1367 = vmatprep.subr.bf16.mxu0 0
      %1368 = vmatpush1.bf16.msra.mxu0 %v999
      %1369 = vmatprep.subr.bf16.mxu0 0
      %1370 = vmatpush1.bf16.msra.mxu0 %v1000
      %1371 = vmatprep.subr.bf16.mxu0 0
      %1372 = vmatpush1.bf16.msra.mxu0 %v1001
      %1373 = vmatprep.subr.bf16.mxu0 0
      %1374 = vmatpush1.bf16.msra.mxu0 %v1002
      %1375 = vmatprep.subr.bf16.mxu0 0
      %1376 = vmatpush1.bf16.msra.mxu0 %v1003
      %1377 = vmatprep.subr.bf16.mxu0 0
      %1378 = vmatpush1.bf16.msra.mxu0 %v1004
      %1379 = vmatprep.subr.bf16.mxu0 0
      %1380 = vmatpush1.bf16.msra.mxu0 %v1005
      %1381 = vmatprep.subr.bf16.mxu0 0
      %1382 = vmatpush1.bf16.msra.mxu0 %v1006
      %1383 = vmatprep.subr.bf16.mxu0 0
      %1384 = vmatpush1.bf16.msra.mxu0 %v1007
      %1385 = vmatprep.subr.bf16.mxu0 0
      %1386 = vmatpush1.bf16.msra.mxu0 %v1008
      %1387 = vmatprep.subr.bf16.mxu0 0
      %1388 = vmatpush1.bf16.msra.mxu0 %v1009
      %1389 = vmatprep.subr.bf16.mxu0 0
      %1390 = vmatpush1.bf16.msra.mxu0 %v1010
      %1391 = vmatprep.subr.bf16.mxu0 0
      %1392 = vmatpush1.bf16.msra.mxu0 %v1011
      %1393 = vmatprep.subr.bf16.mxu0 0
      %1394 = vmatpush1.bf16.msra.mxu0 %v1012
      %1395 = vmatprep.subr.bf16.mxu0 0
      %1396 = vmatpush1.bf16.msra.mxu0 %v1013
      %1397 = vmatprep.subr.bf16.mxu0 0
      %1398 = vmatpush1.bf16.msra.mxu0 %v1014
      %1399 = vmatprep.mubr.bf16.mxu0 %v440
      %1400 = vmatmul.mubr.bf16.gmra.mrb[0].mxu0 %v439
      %v1401 = vpop.f32.mrb[0].mxu0
      %v1402 = vadd.f32 %v1362, %v1401
      %v1403 = vpop.f32.mrb[0].mxu0
      %v1404 = vpop.f32.mrb[0].mxu0
      %v1405 = vpop.f32.mrb[0].mxu0
      %1406 = vdwg.mxu0
      %vm1407 = vcmp.ge.f32.partialorder %v1402, 0.0
      %v1408 = vmul.f32 %v1402, 0.01
      %v1409 = vsel %vm1407, %v1402, %v1408
      %v1410 = vrot.slane %v1409, 4
      %v1411 = vadd.f32 %v1409, %v1410
      %v1412 = vrot.slane %v1411, 2
      %v1413 = vadd.f32 %v1411, %v1412
      %v1414 = vrot.slane %v1413, 1
      %v1415 = vadd.f32 %v1413, %v1414
      %1416 = vst [vmem:[%s166] sm:$0x1] %v1415
      %p1417 = scmp.lt.s32.totalorder %s14, 7
      %s1418 = scalar_select %p1417, %s14, 7
      %s1419 = scalar_lea.vmem %s3, %s1418
      // Predicated region
      $region33: #{conv3d_leakyrelu_avgpool.1} parent=31 // pred_check
        %p1420 = pneg %p100
      $region34: #{conv3d_leakyrelu_avgpool.1} parent=31 // pred_check_branch
        %1422 = sbr.rel (%p1420) target = $region36
      $region35: #{conv3d_leakyrelu_avgpool.1} parent=31 // pred_region
        _
      $region36: #{conv3d_leakyrelu_avgpool.1} parent=31 // pred_fallthru
        _
    $region32: #{conv3d_leakyrelu_avgpool.1} parent=5 // pred_fallthru
      _
    %p1423 = scmp.le.s32.totalorder 2, %s9
    // Predicated region
    $region37: #{conv3d_leakyrelu_avgpool.1} parent=5 // pred_check
      %p1424 = pneg %p1423
    $region38: #{conv3d_leakyrelu_avgpool.1} parent=5 // pred_check_branch
      %1426 = sbr.rel (%p1424) target = $region40
    $region39: #{conv3d_leakyrelu_avgpool.1} parent=5 // pred_region
      %s1427 = ssub.s32 %s9, 2
      // Predicated region
      $region41: #{conv3d_leakyrelu_avgpool.1} parent=39 // pred_check
        %p1428 = pneg %p106
      $region42: #{conv3d_leakyrelu_avgpool.1} parent=39 // pred_check_branch
        %1430 = sbr.rel (%p1428) target = $region44
      $region43: #{conv3d_leakyrelu_avgpool.1} parent=39 // pred_region
        %p1431 = scmp.lt.s32.totalorder %s15, 7
        %s1432 = scalar_select %p1431, %s15, 7
        %s1433 = scalar_lea.vmem %s3, %s1432
      $region44: #{conv3d_leakyrelu_avgpool.1} parent=39 // pred_fallthru
        _
    $region40: #{conv3d_leakyrelu_avgpool.1} parent=5 // pred_fallthru
      _
  $region6: #{conv3d_leakyrelu_avgpool.1} parent=0 // loop_footer
    %s13 = sadd.s32 1, %s9
  $region7: #{conv3d_leakyrelu_avgpool.1} parent=0 // loop_footer_branch
    %8 = sbr.rel target = $region3
  $region8: #{conv3d_leakyrelu_avgpool.1} parent=0 // loop_exit
    _

</llo_original>
